<compile_context>
chip_gen: v5e
topology: v5e:2x2
jax: 0.10.0
libtpu: 0.0.40
codegen_flags: <defaults>
</compile_context>

<pallas_src>
import jax
import jax.numpy as jnp
from jax.experimental import pallas as pl
from jax.experimental.pallas import tpu as pltpu

_LANES = 128
_SUBLANES = 8
_UNROLL_T_MAX = 8          # fully unroll the temporal recurrence up to this T


def _vmem_capacity_bytes():
    try:
        return int(pltpu.get_tpu_info().vmem_capacity_bytes)
    except Exception:
        return 64 * 1024 * 1024      # conservative (v7x per-TC physical VMEM)


# --------------------------------------------------------------------------- #
# Kernels
# --------------------------------------------------------------------------- #
def _kernel_unrolled(thresh_ref, inv_ref, x_ref, o_ref):
    """Small-T path: fully unrolled; x_ref/o_ref are (T+1, block_rows, 128)."""
    del inv_ref                                   # 1/(t+1) is a compile-time const
    T = x_ref.shape[0] - 1                        # static Python int

    x0 = x_ref[0].astype(jnp.float32)
    zeros = jnp.zeros_like(x0)
    thr = zeros + thresh_ref[0]                   # hoisted broadcast (no per-t splat)
    neg_thr = -thr

    o_ref[0] = zeros.astype(o_ref.dtype)          # spike_pot[0] = zeros_like(x[0])

    mem = 0.5 * thr
    exp_net = zeros                               # fused carry: exp_in - exp_out

    for t in range(T):
        xt = x_ref[t + 1].astype(jnp.float32)
        mem = mem + xt + exp_net
        # spike = ZIF(mem - thr)*thr - ZIF(-mem)*thr  ==  nested select
        spike = jnp.where(mem >= thr, thr, jnp.where(mem <= zeros, neg_thr, zeros))
        mem = mem - spike
        o_ref[t + 1] = spike.astype(o_ref.dtype)
        exp_net = exp_net + ((xt - x0) - spike) * (1.0 / float(t + 1))


def _kernel_looped(thresh_ref, inv_ref, x_ref, o_ref, mem_ref, exp_ref):
    """Large-T path: fori_loop with carries in VMEM scratch, 1/(t+1) from SMEM."""
    T = x_ref.shape[0] - 1

    x0 = x_ref[0].astype(jnp.float32)
    zeros = jnp.zeros_like(x0)
    thr = zeros + thresh_ref[0]
    neg_thr = -thr

    o_ref[0] = zeros.astype(o_ref.dtype)
    mem_ref[...] = 0.5 * thr
    exp_ref[...] = zeros

    def body(t, carry):
        xt = x_ref[t + 1].astype(jnp.float32)
        mem = mem_ref[...] + xt + exp_ref[...]
        spike = jnp.where(mem >= thr, thr, jnp.where(mem <= zeros, neg_thr, zeros))
        mem_ref[...] = mem - spike
        o_ref[t + 1] = spike.astype(o_ref.dtype)
        exp_ref[...] = exp_ref[...] + ((xt - x0) - spike) * inv_ref[t]
        return carry

    jax.lax.fori_loop(0, T, body, 0)


# --------------------------------------------------------------------------- #
# Tiling heuristics
# --------------------------------------------------------------------------- #
def _choose_block_rows(rows_total, tp1, io_itemsize):
    """Pick a VMEM-safe, layout-legal block row count, favouring 512-1024 rows."""
    # sublane granularity for the I/O dtype (f32 -> 8, bf16 -> 16)
    sub = _SUBLANES * max(1, 4 // io_itemsize)
    if rows_total <= sub:
        return rows_total                          # full-extent block (always legal)

    # per-row resident bytes: 2x double-buffered in + out slabs (4 * (T+1) in
    # I/O dtype) plus f32 carries/temps (x0, thr, mem, exp_net, spike, xt).
    bytes_per_row = 4 * tp1 * _LANES * io_itemsize + 6 * _LANES * 4
    budget = min(_vmem_capacity_bytes() // 4, 24 * 1024 * 1024)
    max_rows = max(sub, (budget // bytes_per_row) // sub * sub)

    # memory-bound elementwise kernel: 512-1024 row tiles sit at ~85% of HBM
    # roofline; never split below 512 just for grid granularity.
    block_rows = min(1024, max_rows)

    # v7x megacore: prefer >= 4 grid steps (>= 2 blocks per core so each core's
    # double-buffer pipeline has something to overlap), as long as tiles stay
    # >= 512 rows.  Extra splits are near-free on single-TC v5e/v6e.
    if block_rows > 512 and rows_total >= 4 * 512:
        quarter = (rows_total // 4) // sub * sub
        block_rows = min(block_rows, max(512, quarter))

    block_rows = max(sub, (block_rows // sub) * sub)
    if block_rows >= rows_total:
        block_rows = rows_total
    return block_rows


# --------------------------------------------------------------------------- #
# Wrapper
# --------------------------------------------------------------------------- #
def if_diff_line_forward(x, thresh, T):
    """x: ((T+1)*B, C, H, W), NCHW.  Returns spikes, same shape & dtype."""
    tp1 = T + 1
    n, c, h, w = x.shape
    assert n % tp1 == 0, "leading dim must be (T+1)*B"
    b = n // tp1

    dtype = x.dtype                                # keep I/O in input dtype (bf16 ok)
    io_itemsize = jnp.dtype(dtype).itemsize

    m = b * c * h * w
    rows_total = pl.cdiv(m, _LANES)
    m_pad = rows_total * _LANES

    xt = x.reshape(tp1, m)
    if m_pad != m:
        # Ragged lane edge: tiny pad to the next 128-lane boundary.  This is an
        # extra HBM pass — pre-pad upstream if this path is ever hot.
        xt = jnp.pad(xt, ((0, 0), (0, m_pad - m)))
    xt = xt.reshape(tp1, rows_total, _LANES)

    block_rows = _choose_block_rows(rows_total, tp1, io_itemsize)
    grid = (pl.cdiv(rows_total, block_rows),)

    # Explicit VMEM limit: 2x(in block) + 2x(out block) pipeline buffers +
    # f32 carries/temps + headroom for unrolled-loop temporaries.
    block_bytes = tp1 * block_rows * _LANES * io_itemsize
    carry_bytes = 6 * block_rows * _LANES * 4
    vmem_limit = 4 * block_bytes + carry_bytes + (4 << 20)
    vmem_limit = max(vmem_limit, 16 << 20)
    vmem_limit = min(vmem_limit, _vmem_capacity_bytes() - (4 << 20))

    thresh_arr = jnp.asarray(thresh, jnp.float32).reshape((1,))
    inv_arr = 1.0 / jnp.arange(1, max(T, 1) + 1, dtype=jnp.float32)   # exact 1/(t+1)

    unrolled = T <= _UNROLL_T_MAX
    kernel = _kernel_unrolled if unrolled else _kernel_looped
    scratch = () if unrolled else (
        pltpu.VMEM((block_rows, _LANES), jnp.float32),   # mem carry
        pltpu.VMEM((block_rows, _LANES), jnp.float32),   # exp_net carry
    )

    out = pl.pallas_call(
        kernel,
        out_shape=jax.ShapeDtypeStruct((tp1, rows_total, _LANES), dtype),
        grid=grid,
        in_specs=[
            pl.BlockSpec(memory_space=pltpu.MemorySpace.SMEM),             # thresh
            pl.BlockSpec(memory_space=pltpu.MemorySpace.SMEM),             # 1/(t+1)
            pl.BlockSpec((tp1, block_rows, _LANES), lambda i: (0, i, 0)),  # x tile
        ],
        out_specs=pl.BlockSpec((tp1, block_rows, _LANES), lambda i: (0, i, 0)),
        scratch_shapes=scratch,
        compiler_params=pltpu.CompilerParams(
            dimension_semantics=("parallel",),
            vmem_limit_bytes=int(vmem_limit)),
    )(thresh_arr, inv_arr, xt)

    out = out.reshape(tp1, m_pad)
    if m_pad != m:
        out = out[:, :m]
    return out.reshape(n, c, h, w)


# --------------------------------------------------------------------------- #
# Pure-JAX reference (mirrors the typo-fixed PyTorch 'm' branch, unfused carries)
# --------------------------------------------------------------------------- #
def _reference_forward(x, thresh, T):
    tp1 = T + 1
    n, c, h, w = x.shape
    b = n // tp1
    xs = x.reshape(tp1, b, c, h, w).astype(jnp.float32)
    mem = 0.5 * thresh
    spike_pot = [jnp.zeros_like(xs[0])]
    exp_in = jnp.zeros_like(xs[0])
    exp_out = jnp.zeros_like(xs[0])
    for t in range(T):
        mem = mem + xs[t + 1] + exp_in - exp_out
        spike = (mem - thresh >= 0).astype(jnp.float32) * thresh
        spike_neg = (-mem >= 0).astype(jnp.float32) * thresh
        spike = spike - spike_neg
        mem = mem - spike
        spike_pot.append(spike)
        exp_in = exp_in + (xs[t + 1] - xs[0]) / (t + 1)
        exp_out = exp_out + spike / (t + 1)
    out = jnp.stack(spike_pot, axis=0)
    return out.reshape(n, c, h, w).astype(x.dtype)


if __name__ == "__main__":
    T = 4                        # number of temporal update steps
    B, C, H, W = 2, 4, 16, 16

    # Deterministic parameter init (nn.Parameter(thresh)), thresh = 1.0
    thresh = jnp.float32(1.0)

    key = jax.random.PRNGKey(0)
    x = jax.random.normal(key, ((T + 1) * B, C, H, W), dtype=jnp.float32)

    out = if_diff_line_forward(x, thresh, T)
    out = jax.block_until_ready(out)

    ref = _reference_forward(x, thresh, T)
    assert out.shape == x.shape
    # exp_net fusion is an FP reassociation -> validate with a slightly looser atol
    assert jnp.allclose(out, ref, atol=1e-5), "mismatch vs reference"

    print("KERNEL_OK")
</pallas_src>

<mosaic_0001>
module attributes {stable_mosaic.version = 11 : i64} {
  func.func @_kernel_unrolled(%arg0: i32, %arg1: memref<1xf32, #tpu.memory_space<smem>>, %arg2: memref<4xf32, #tpu.memory_space<smem>>, %arg3: memref<5x16x128xf32, #tpu.memory_space<vmem>>, %arg4: memref<5x16x128xf32, #tpu.memory_space<vmem>>) attributes {dimension_semantics = [#tpu.dimension_semantics<parallel>], iteration_bounds = array<i64: 1>, scalar_prefetch = 0 : i64, scratch_operands = 0 : i64, tpu.core_type = #tpu.core_type<tc>, window_params = [{transform_indices = @transform_0, window_bounds = array<i64: 1>}, {transform_indices = @transform_1, window_bounds = array<i64: 4>}, {transform_indices = @transform_2, window_bounds = array<i64: 5, 16, 128>}, {transform_indices = @transform_3, window_bounds = array<i64: 5, 16, 128>}]} {
    %c0 = arith.constant 0 : index
    %c0_0 = arith.constant 0 : index
    %c0_1 = arith.constant 0 : index
    %0 = vector.load %arg3[%c0, %c0_0, %c0_1] : memref<5x16x128xf32, #tpu.memory_space<vmem>>, vector<1x16x128xf32>
    %1 = vector.shape_cast %0 : vector<1x16x128xf32> to vector<16x128xf32>
    %cst = arith.constant 0.000000e+00 : f32
    %2 = vector.broadcast %cst : f32 to vector<16x128xf32>
    %c0_2 = arith.constant 0 : index
    %3 = memref.load %arg1[%c0_2] : memref<1xf32, #tpu.memory_space<smem>>
    %4 = vector.broadcast %3 : f32 to vector<16x128xf32>
    %5 = arith.addf %2, %4 : vector<16x128xf32>
    %cst_3 = arith.constant 0.000000e+00 : f32
    %6 = vector.broadcast %cst_3 : f32 to vector<16x128xf32>
    %7 = arith.subf %6, %5 : vector<16x128xf32>
    %c0_4 = arith.constant 0 : index
    %c0_5 = arith.constant 0 : index
    %c0_6 = arith.constant 0 : index
    %8 = vector.load %arg4[%c0_4, %c0_5, %c0_6] : memref<5x16x128xf32, #tpu.memory_space<vmem>>, vector<1x16x128xf32>
    %9 = vector.shape_cast %8 : vector<1x16x128xf32> to vector<16x128xf32>
    %10 = vector.shape_cast %2 : vector<16x128xf32> to vector<1x16x128xf32>
    tpu.vector_store %arg4[%c0_4, %c0_5, %c0_6], %10 {strides = array<i32>} : memref<5x16x128xf32, #tpu.memory_space<vmem>>, vector<1x16x128xf32>,
    %cst_7 = arith.constant 5.000000e-01 : f32
    %11 = vector.broadcast %cst_7 : f32 to vector<16x128xf32>
    %12 = arith.mulf %11, %5 : vector<16x128xf32>
    %c1 = arith.constant 1 : index
    %c0_8 = arith.constant 0 : index
    %c0_9 = arith.constant 0 : index
    %13 = vector.load %arg3[%c1, %c0_8, %c0_9] : memref<5x16x128xf32, #tpu.memory_space<vmem>>, vector<1x16x128xf32>
    %14 = vector.shape_cast %13 : vector<1x16x128xf32> to vector<16x128xf32>
    %15 = arith.addf %12, %14 : vector<16x128xf32>
    %16 = arith.addf %15, %2 : vector<16x128xf32>
    %17 = arith.cmpf oge, %16, %5 : vector<16x128xf32>
    %18 = arith.cmpf ole, %16, %2 : vector<16x128xf32>
    %19 = arith.select %18, %7, %2 : vector<16x128xi1>, vector<16x128xf32>
    %20 = arith.select %17, %5, %19 : vector<16x128xi1>, vector<16x128xf32>
    %21 = arith.subf %16, %20 : vector<16x128xf32>
    %c1_10 = arith.constant 1 : index
    %c0_11 = arith.constant 0 : index
    %c0_12 = arith.constant 0 : index
    %22 = vector.load %arg4[%c1_10, %c0_11, %c0_12] : memref<5x16x128xf32, #tpu.memory_space<vmem>>, vector<1x16x128xf32>
    %23 = vector.shape_cast %22 : vector<1x16x128xf32> to vector<16x128xf32>
    %24 = vector.shape_cast %20 : vector<16x128xf32> to vector<1x16x128xf32>
    tpu.vector_store %arg4[%c1_10, %c0_11, %c0_12], %24 {strides = array<i32>} : memref<5x16x128xf32, #tpu.memory_space<vmem>>, vector<1x16x128xf32>,
    %25 = arith.subf %14, %1 : vector<16x128xf32>
    %26 = arith.subf %25, %20 : vector<16x128xf32>
    %cst_13 = arith.constant 1.000000e+00 : f32
    %27 = vector.broadcast %cst_13 : f32 to vector<16x128xf32>
    %28 = arith.mulf %26, %27 : vector<16x128xf32>
    %29 = arith.addf %2, %28 : vector<16x128xf32>
    %c2 = arith.constant 2 : index
    %c0_14 = arith.constant 0 : index
    %c0_15 = arith.constant 0 : index
    %30 = vector.load %arg3[%c2, %c0_14, %c0_15] : memref<5x16x128xf32, #tpu.memory_space<vmem>>, vector<1x16x128xf32>
    %31 = vector.shape_cast %30 : vector<1x16x128xf32> to vector<16x128xf32>
    %32 = arith.addf %21, %31 : vector<16x128xf32>
    %33 = arith.addf %32, %29 : vector<16x128xf32>
    %34 = arith.cmpf oge, %33, %5 : vector<16x128xf32>
    %35 = arith.cmpf ole, %33, %2 : vector<16x128xf32>
    %36 = arith.select %35, %7, %2 : vector<16x128xi1>, vector<16x128xf32>
    %37 = arith.select %34, %5, %36 : vector<16x128xi1>, vector<16x128xf32>
    %38 = arith.subf %33, %37 : vector<16x128xf32>
    %c2_16 = arith.constant 2 : index
    %c0_17 = arith.constant 0 : index
    %c0_18 = arith.constant 0 : index
    %39 = vector.load %arg4[%c2_16, %c0_17, %c0_18] : memref<5x16x128xf32, #tpu.memory_space<vmem>>, vector<1x16x128xf32>
    %40 = vector.shape_cast %39 : vector<1x16x128xf32> to vector<16x128xf32>
    %41 = vector.shape_cast %37 : vector<16x128xf32> to vector<1x16x128xf32>
    tpu.vector_store %arg4[%c2_16, %c0_17, %c0_18], %41 {strides = array<i32>} : memref<5x16x128xf32, #tpu.memory_space<vmem>>, vector<1x16x128xf32>,
    %42 = arith.subf %31, %1 : vector<16x128xf32>
    %43 = arith.subf %42, %37 : vector<16x128xf32>
    %cst_19 = arith.constant 5.000000e-01 : f32
    %44 = vector.broadcast %cst_19 : f32 to vector<16x128xf32>
    %45 = arith.mulf %43, %44 : vector<16x128xf32>
    %46 = arith.addf %29, %45 : vector<16x128xf32>
    %c3 = arith.constant 3 : index
    %c0_20 = arith.constant 0 : index
    %c0_21 = arith.constant 0 : index
    %47 = vector.load %arg3[%c3, %c0_20, %c0_21] : memref<5x16x128xf32, #tpu.memory_space<vmem>>, vector<1x16x128xf32>
    %48 = vector.shape_cast %47 : vector<1x16x128xf32> to vector<16x128xf32>
    %49 = arith.addf %38, %48 : vector<16x128xf32>
    %50 = arith.addf %49, %46 : vector<16x128xf32>
    %51 = arith.cmpf oge, %50, %5 : vector<16x128xf32>
    %52 = arith.cmpf ole, %50, %2 : vector<16x128xf32>
    %53 = arith.select %52, %7, %2 : vector<16x128xi1>, vector<16x128xf32>
    %54 = arith.select %51, %5, %53 : vector<16x128xi1>, vector<16x128xf32>
    %55 = arith.subf %50, %54 : vector<16x128xf32>
    %c3_22 = arith.constant 3 : index
    %c0_23 = arith.constant 0 : index
    %c0_24 = arith.constant 0 : index
    %56 = vector.load %arg4[%c3_22, %c0_23, %c0_24] : memref<5x16x128xf32, #tpu.memory_space<vmem>>, vector<1x16x128xf32>
    %57 = vector.shape_cast %56 : vector<1x16x128xf32> to vector<16x128xf32>
    %58 = vector.shape_cast %54 : vector<16x128xf32> to vector<1x16x128xf32>
    tpu.vector_store %arg4[%c3_22, %c0_23, %c0_24], %58 {strides = array<i32>} : memref<5x16x128xf32, #tpu.memory_space<vmem>>, vector<1x16x128xf32>,
    %59 = arith.subf %48, %1 : vector<16x128xf32>
    %60 = arith.subf %59, %54 : vector<16x128xf32>
    %cst_25 = arith.constant 0.333333343 : f32
    %61 = vector.broadcast %cst_25 : f32 to vector<16x128xf32>
    %62 = arith.mulf %60, %61 : vector<16x128xf32>
    %63 = arith.addf %46, %62 : vector<16x128xf32>
    %c4 = arith.constant 4 : index
    %c0_26 = arith.constant 0 : index
    %c0_27 = arith.constant 0 : index
    %64 = vector.load %arg3[%c4, %c0_26, %c0_27] : memref<5x16x128xf32, #tpu.memory_space<vmem>>, vector<1x16x128xf32>
    %65 = vector.shape_cast %64 : vector<1x16x128xf32> to vector<16x128xf32>
    %66 = arith.addf %55, %65 : vector<16x128xf32>
    %67 = arith.addf %66, %63 : vector<16x128xf32>
    %68 = arith.cmpf oge, %67, %5 : vector<16x128xf32>
    %69 = arith.cmpf ole, %67, %2 : vector<16x128xf32>
    %70 = arith.select %69, %7, %2 : vector<16x128xi1>, vector<16x128xf32>
    %71 = arith.select %68, %5, %70 : vector<16x128xi1>, vector<16x128xf32>
    %c4_28 = arith.constant 4 : index
    %c0_29 = arith.constant 0 : index
    %c0_30 = arith.constant 0 : index
    %72 = vector.load %arg4[%c4_28, %c0_29, %c0_30] : memref<5x16x128xf32, #tpu.memory_space<vmem>>, vector<1x16x128xf32>
    %73 = vector.shape_cast %72 : vector<1x16x128xf32> to vector<16x128xf32>
    %74 = vector.shape_cast %71 : vector<16x128xf32> to vector<1x16x128xf32>
    tpu.vector_store %arg4[%c4_28, %c0_29, %c0_30], %74 {strides = array<i32>} : memref<5x16x128xf32, #tpu.memory_space<vmem>>, vector<1x16x128xf32>,
    return
  }
  func.func @transform_0(%arg0: i32) -> i32 {
    %c0_i32 = arith.constant 0 : i32
    %c0_i32_0 = arith.constant 0 : i32
    return %c0_i32 : i32
  }
  func.func @transform_1(%arg0: i32) -> i32 {
    %c0_i32 = arith.constant 0 : i32
    %c0_i32_0 = arith.constant 0 : i32
    return %c0_i32 : i32
  }
  func.func @transform_2(%arg0: i32) -> (i32, i32, i32) {
    %c0_i32 = arith.constant 0 : i32
    %c0_i32_0 = arith.constant 0 : i32
    %c0_i32_1 = arith.constant 0 : i32
    return %c0_i32, %arg0, %c0_i32_0 : i32, i32, i32
  }
  func.func @transform_3(%arg0: i32) -> (i32, i32, i32) {
    %c0_i32 = arith.constant 0 : i32
    %c0_i32_0 = arith.constant 0 : i32
    %c0_i32_1 = arith.constant 0 : i32
    return %c0_i32, %arg0, %c0_i32_0 : i32, i32, i32
  }
}

</mosaic_0001>

<llo_original>
// kernel: tpu_custom_call.1
$region0: #{tpu_custom_call.1}
  #allocation0 [shape = 'u32[]', space=smem, size = 0x4, offset = 0x4, fixed_abs, tag = 'smem constant byte address 0x4 - core index']
  #allocation1 [shape = 'u32[72,128]{1,0:T(1,128)}', space=vmem, size = 0x9000, scoped, tag = 'internal scratch']
  #allocation2 [shape = 'f32[1]{0:T(128)S(6)}', space=smem, size = 0x200, scoped, tag = 'scoped memory for tpu_custom_call.1']
  %s0 = inlined_call_operand.<no memory space> [shape: f32[1], index: 0, kind: input, shape index: {}]
  %s1 = inlined_call_operand.vmem [shape: f32[4], index: 1, kind: input, shape index: {}]
  %s2 = inlined_call_operand.hbm [shape: f32[5,16,128], index: 2, kind: input, shape index: {}]
  %s3 = inlined_call_operand.hbm [shape: f32[5,16,128], index: 3, kind: output, shape index: {}]
  %s4 = sld [smem:[#allocation0]]
  $region30: #{tpu_custom_call.1} parent=0
    _
  %s6 = ssub.s32 1, %s4
  %s7 = scalar_select 0, %s6, %s4
  %8 = sst [smem:[#allocation2]] %s0
  $region1: #{tpu_custom_call.1} parent=0
    #allocation3 [shape = 'u8[512]{0}', space=smem, size = 0x200, scoped, tag = 'input window, operand 1, single buffered']
    #allocation4 [shape = 's32[1]{0}', space=sflag, size = 0x4, scoped, tag = 'scoped memory for tpu_custom_call.1']
    #allocation5 [shape = 's32[1]{0}', space=sflag, size = 0x4, scoped, tag = 'scoped memory for tpu_custom_call.1']
    #allocation6 [shape = 's32[1]{0}', space=sflag, size = 0x4, scoped, tag = 'scoped memory for tpu_custom_call.1']
    #allocation7 [shape = 'u8[40960]{0}', space=vmem, size = 0xa000, scoped, tag = 'input window, operand 2, single buffered']
    #allocation8 [shape = 'u8[40960]{0}', space=vmem, size = 0xa000, scoped, tag = 'output window, operand 0, single buffered']
    %9 = vsyncpa [#allocation6], 0
    %10 = vsyncpa [#allocation4], 0
    %11 = vsyncpa [#allocation5], 0
    // Predicated region
    $region2: #{tpu_custom_call.1} parent=1 // pred_check
      _
    $region3: #{tpu_custom_call.1} parent=1 // pred_check_branch
      %13 = sbr.rel (0) target = $region5
    $region4: #{tpu_custom_call.1} parent=1 // pred_region
      _
    $region5: #{tpu_custom_call.1} parent=1 // pred_fallthru
      _
    // Predicated region
    $region6: #{tpu_custom_call.1} parent=1 // pred_check
      _
    $region7: #{tpu_custom_call.1} parent=1 // pred_check_branch
      %15 = sbr.rel (0) target = $region9
    $region8: #{tpu_custom_call.1} parent=1 // pred_region
      %17 = vsyncadd [#allocation6], 0
      %s19 = sshll.u32 %s1, 4
      %s20 = int_to_ptr.vmem [resolvable:$true] %s19
      %22 = dma.vmem_to_smem %s20, 16, [#allocation3], [#allocation6]
    $region9: #{tpu_custom_call.1} parent=1 // pred_fallthru
      _
    // Predicated region
    $region10: #{tpu_custom_call.1} parent=1 // pred_check
      _
    $region11: #{tpu_custom_call.1} parent=1 // pred_check_branch
      %24 = sbr.rel (0) target = $region13
    $region12: #{tpu_custom_call.1} parent=1 // pred_region
      %26 = vsyncadd [#allocation4], 0
      %s27 = sshll.u32 %s2, 4
      %s28 = int_to_ptr.hbm [resolvable:$true] %s27
      %s29 = sshll.u32 [#allocation7], 4
      %s30 = int_to_ptr.vmem [resolvable:$true] %s29
      %35 = dma.hbm_to_vmem [thread:$0]  %s28, 1280, %s30, [#allocation4], 128, 128, 8
    $region13: #{tpu_custom_call.1} parent=1 // pred_fallthru
      _
    // Predicated region
    $region14: #{tpu_custom_call.1} parent=1 // pred_check
      _
    $region15: #{tpu_custom_call.1} parent=1 // pred_check_branch
      %37 = sbr.rel (0) target = $region17
    $region16: #{tpu_custom_call.1} parent=1 // pred_region
      %39 = dma.done [#allocation6], 16
    $region17: #{tpu_custom_call.1} parent=1 // pred_fallthru
      _
    // Predicated region
    $region18: #{tpu_custom_call.1} parent=1 // pred_check
      _
    $region19: #{tpu_custom_call.1} parent=1 // pred_check_branch
      %41 = sbr.rel (0) target = $region21
    $region20: #{tpu_custom_call.1} parent=1 // pred_region
      %43 = dma.done [#allocation4], 1280
    $region21: #{tpu_custom_call.1} parent=1 // pred_fallthru
      _
    %44 = sfence
    %v45 = vld [vmem:[#allocation7] sm:$0xff]
    %v46 = vld [vmem:[#allocation7 + $0x8] sm:$0xff]
    %s47 = sld [smem:[#allocation2]]
    %v48 = vstv %s47
    %v49 = vadd.f32 %v48, 0.0
    %v50 = vsub.f32 0.0, %v49
    %51 = vst [vmem:[#allocation8] sm:$0xff] 0.0
    %52 = vst [vmem:[#allocation8 + $0x8] sm:$0xff] 0.0
    %v53 = vmul.f32 %v49, 0.5
    %s54 = scalar_lea.vmem [#allocation7], 16
    %v55 = vld [vmem:[%s54] sm:$0xff]
    %v56 = vld [vmem:[%s54 + $0x8] sm:$0xff]
    %v57 = vadd.f32 %v53, %v55
    %v58 = vadd.f32 %v53, %v56
    %v59 = vadd.f32 %v57, 0.0
    %v60 = vadd.f32 %v58, 0.0
    %vm61 = vcmp.ge.f32.partialorder %v59, %v49
    %vm62 = vcmp.ge.f32.partialorder %v60, %v49
    %vm63 = vcmp.le.f32.partialorder %v59, 0.0
    %vm64 = vcmp.le.f32.partialorder %v60, 0.0
    %v65 = vsel %vm63, %v50, 0.0
    %v66 = vsel %vm64, %v50, 0.0
    %v67 = vsel %vm61, %v49, %v65
    %v68 = vsel %vm62, %v49, %v66
    %v69 = vsub.f32 %v59, %v67
    %v70 = vsub.f32 %v60, %v68
    %s71 = scalar_lea.vmem [#allocation8], 16
    %72 = vst [vmem:[%s71] sm:$0xff] %v67
    %73 = vst [vmem:[%s71 + $0x8] sm:$0xff] %v68
    %v74 = vsub.f32 %v55, %v45
    %v75 = vsub.f32 %v56, %v46
    %v76 = vsub.f32 %v74, %v67
    %v77 = vsub.f32 %v75, %v68
    %v78 = vadd.f32 %v76, 0.0
    %v79 = vadd.f32 %v77, 0.0
    %s80 = scalar_lea.vmem [#allocation7], 32
    %v81 = vld [vmem:[%s80] sm:$0xff]
    %v82 = vld [vmem:[%s80 + $0x8] sm:$0xff]
    %v83 = vadd.f32 %v69, %v81
    %v84 = vadd.f32 %v70, %v82
    %v85 = vadd.f32 %v83, %v78
    %v86 = vadd.f32 %v84, %v79
    %vm87 = vcmp.ge.f32.partialorder %v85, %v49
    %vm88 = vcmp.ge.f32.partialorder %v86, %v49
    %vm89 = vcmp.le.f32.partialorder %v85, 0.0
    %vm90 = vcmp.le.f32.partialorder %v86, 0.0
    %v91 = vsel %vm89, %v50, 0.0
    %v92 = vsel %vm90, %v50, 0.0
    %v93 = vsel %vm87, %v49, %v91
    %v94 = vsel %vm88, %v49, %v92
    %v95 = vsub.f32 %v85, %v93
    %v96 = vsub.f32 %v86, %v94
    %s97 = scalar_lea.vmem [#allocation8], 32
    %98 = vst [vmem:[%s97] sm:$0xff] %v93
    %99 = vst [vmem:[%s97 + $0x8] sm:$0xff] %v94
    %v100 = vsub.f32 %v81, %v45
    %v101 = vsub.f32 %v82, %v46
    %v102 = vsub.f32 %v100, %v93
    %v103 = vsub.f32 %v101, %v94
    %v104 = vmul.f32 %v102, 0.5
    %v105 = vmul.f32 %v103, 0.5
    %v106 = vadd.f32 %v78, %v104
    %v107 = vadd.f32 %v79, %v105
    %s108 = scalar_lea.vmem [#allocation7], 48
    %v109 = vld [vmem:[%s108] sm:$0xff]
    %v110 = vld [vmem:[%s108 + $0x8] sm:$0xff]
    %v111 = vadd.f32 %v95, %v109
    %v112 = vadd.f32 %v96, %v110
    %v113 = vadd.f32 %v111, %v106
    %v114 = vadd.f32 %v112, %v107
    %vm115 = vcmp.ge.f32.partialorder %v113, %v49
    %vm116 = vcmp.ge.f32.partialorder %v114, %v49
    %vm117 = vcmp.le.f32.partialorder %v113, 0.0
    %vm118 = vcmp.le.f32.partialorder %v114, 0.0
    %v119 = vsel %vm117, %v50, 0.0
    %v120 = vsel %vm118, %v50, 0.0
    %v121 = vsel %vm115, %v49, %v119
    %v122 = vsel %vm116, %v49, %v120
    %v123 = vsub.f32 %v113, %v121
    %v124 = vsub.f32 %v114, %v122
    %s125 = scalar_lea.vmem [#allocation8], 48
    %126 = vst [vmem:[%s125] sm:$0xff] %v121
    %127 = vst [vmem:[%s125 + $0x8] sm:$0xff] %v122
    %v128 = vsub.f32 %v109, %v45
    %v129 = vsub.f32 %v110, %v46
    %v130 = vsub.f32 %v128, %v121
    %v131 = vsub.f32 %v129, %v122
    %v132 = vmul.f32 %v130, 0.33333334
    %v133 = vmul.f32 %v131, 0.33333334
    %v134 = vadd.f32 %v106, %v132
    %v135 = vadd.f32 %v107, %v133
    %s136 = scalar_lea.vmem [#allocation7], 64
    %v137 = vld [vmem:[%s136] sm:$0xff]
    %v138 = vld [vmem:[%s136 + $0x8] sm:$0xff]
    %v139 = vadd.f32 %v123, %v137
    %v140 = vadd.f32 %v124, %v138
    %v141 = vadd.f32 %v139, %v134
    %v142 = vadd.f32 %v140, %v135
    %vm143 = vcmp.ge.f32.partialorder %v141, %v49
    %vm144 = vcmp.ge.f32.partialorder %v142, %v49
    %vm145 = vcmp.le.f32.partialorder %v141, 0.0
    %vm146 = vcmp.le.f32.partialorder %v142, 0.0
    %v147 = vsel %vm145, %v50, 0.0
    %v148 = vsel %vm146, %v50, 0.0
    %v149 = vsel %vm143, %v49, %v147
    %v150 = vsel %vm144, %v49, %v148
    %s151 = scalar_lea.vmem [#allocation8], 64
    %152 = vst [vmem:[%s151] sm:$0xff] %v149
    %153 = vst [vmem:[%s151 + $0x8] sm:$0xff] %v150
    // Predicated region
    $region22: #{tpu_custom_call.1} parent=1 // pred_check
      _
    $region23: #{tpu_custom_call.1} parent=1 // pred_check_branch
      %155 = sbr.rel (0) target = $region25
    $region24: #{tpu_custom_call.1} parent=1 // pred_region
      %157 = vsyncadd [#allocation5], 0
      %s158 = sshll.u32 [#allocation8], 4
      %s159 = int_to_ptr.vmem [resolvable:$true] %s158
      %s160 = sshll.u32 %s3, 4
      %s161 = int_to_ptr.hbm [resolvable:$true] %s160
      %166 = dma.vmem_to_hbm [thread:$0]  %s159, 1280, %s161, [#allocation5], 128, 128, 8
    $region25: #{tpu_custom_call.1} parent=1 // pred_fallthru
      _
    // Predicated region
    $region26: #{tpu_custom_call.1} parent=1 // pred_check
      _
    $region27: #{tpu_custom_call.1} parent=1 // pred_check_branch
      %168 = sbr.rel (0) target = $region29
    $region28: #{tpu_custom_call.1} parent=1 // pred_region
      %170 = dma.done [#allocation5], 1280
    $region29: #{tpu_custom_call.1} parent=1 // pred_fallthru
      _
    %171 = vsyncpa [#allocation4], 1
    %172 = vsyncpa [#allocation5], 1
    %173 = vsyncpa [#allocation6], 1

</llo_original>
